<compile_context>
chip_gen: v5e
topology: v5e:2x2
jax: 0.10.0
libtpu: 0.0.40
codegen_flags: <defaults>
</compile_context>

<pallas_src>
import jax
import jax.numpy as jnp
from jax.experimental import pallas as pl
from jax.experimental.pallas import tpu as pltpu

# ---- static config (small, consistent with the module) ----
N_NODES   = 8     # nodes per graph
IN_DIM    = 32
NUM_HEADS = 4
OUT_DIM   = 8
ALPHA     = 0.2   # LeakyReLU negative slope
NEG_BIAS  = -1e9  # additive softmax mask for non-edges


def gat2_kernel(x_ref, bias_ref, w1t_ref, w2f_ref, apack_ref,
                expand_ref, selmask_ref, gsum_ref, bdmask_ref, out_ref):
    alpha = jnp.float32(ALPHA)
    H, N = NUM_HEADS, N_NODES

    x = x_ref[...]                                                          # (N, IN)

    # fc1 -> LeakyReLU
    ft1 = jnp.dot(x, w1t_ref[...], preferred_element_type=jnp.float32)      # (N, IN)
    h2 = jnp.where(ft1 > 0, ft1, alpha * ft1)

    # fc2 as ONE 2-D matmul; heads live on lanes: ft2[n, h*D + d]
    ft2 = jnp.dot(h2, w2f_ref[...], preferred_element_type=jnp.float32)     # (N, H*D)

    # Both attention projections in ONE matmul against the block-packed weights:
    #   scores[n, h]     = <ft2[n, h*D:(h+1)*D], attn_l[h]>   (a1: per-source score)
    #   scores[n, H + h] = <ft2[n, h*D:(h+1)*D], attn_r[h]>   (a2: per-destination score)
    scores = jnp.dot(ft2, apack_ref[...], preferred_element_type=jnp.float32)  # (N, 2H)
    a1 = scores[:, :H]                                                      # (N, H)
    a2 = scores[:, H:]                                                      # (N, H)

    # Flat 2-D edge scores e[dst, h*N + src] (heads folded into lanes):
    #   dst term: a2 broadcast across each head's lane group  -> matmul vs a constant
    #   src term: a1 moved onto lanes via mask + sublane reduce -> row vector (1, H*N)
    m_dst = jnp.dot(a2, expand_ref[...], preferred_element_type=jnp.float32)   # (N, H*N)
    m_src = jnp.dot(a1, expand_ref[...], preferred_element_type=jnp.float32)   # (N, H*N)
    a1_row = jnp.sum(m_src * selmask_ref[...], axis=0, keepdims=True)          # (1, H*N)

    e = m_dst + a1_row                                                      # a2[dst,h] + a1[src,h]
    e = jnp.where(e > 0, e, alpha * e)                                      # LeakyReLU
    # Single additive mask; host-side self-loops guarantee every (dst, head) row
    # has at least one live lane, so no denom-epsilon is needed.
    e = e + bias_ref[...]

    # Per-(dst, head) softmax over src. The row-global max is a valid shift for every
    # head group (softmax is shift-invariant), so one lane reduce suffices.
    m = jnp.max(e, axis=-1, keepdims=True)                                  # (N, 1)
    p = jnp.exp(e - m)                                                      # (N, H*N); masked lanes -> 0
    denom = jnp.dot(p, gsum_ref[...], preferred_element_type=jnp.float32)   # per-group sums, bcast
    att = p / denom                                                         # exact divide (review #5)

    # Aggregation as ONE matmul against the block-diagonal ft2: the (N, H*D) result
    # lands directly in the lane layout of the store (no concatenate / lane shifts).
    ft2_bd = jnp.concatenate([ft2] * H, axis=0) * bdmask_ref[...]           # (H*N, H*D)
    out_ref[...] = jnp.dot(att, ft2_bd, preferred_element_type=jnp.float32)


def gat2_forward(x, adj, W1, W2, attn_l, attn_r):
    """x: (G, N, IN) node features; adj: (G, N, N) with adj[g, dst, src] = 1 on edges."""
    G = x.shape[0]
    H, N, D = NUM_HEADS, N_NODES, OUT_DIM

    # ---- host-side dense packing (review #1, #2, #10) ----
    w1t = W1.T                                                              # (IN, IN)
    w2f = W2.T                                                              # (IN, H*D)

    head_of_hd = jnp.arange(H * D) // D          # head owning each ft2 lane
    head_of_hn = jnp.arange(H * N) // N          # head owning each (h, src) lane

    # block-packed [attn_l | attn_r]: (H*D, 2H)
    apack = jnp.zeros((H * D, 2 * H), jnp.float32)
    apack = apack.at[jnp.arange(H * D), head_of_hd].set(attn_l.reshape(H * D))
    apack = apack.at[jnp.arange(H * D), H + head_of_hd].set(attn_r.reshape(H * D))

    # constant structure matrices (tiny, live in VMEM across the whole grid)
    expand  = (jnp.arange(H)[:, None] == head_of_hn[None, :]).astype(jnp.float32)   # (H, H*N)
    selmask = jnp.tile(jnp.eye(N, dtype=jnp.float32), (1, H))                        # (N, H*N)
    gsum    = (head_of_hn[:, None] == head_of_hn[None, :]).astype(jnp.float32)       # (H*N, H*N)
    bdmask  = (head_of_hn[:, None] == head_of_hd[None, :]).astype(jnp.float32)       # (H*N, H*D)

    # single additive softmax mask, precomputed per graph, tiled per head group
    bias = jnp.where(adj > 0, 0.0, NEG_BIAS).astype(jnp.float32)                     # (G, N, N)
    bias_wide = jnp.tile(bias, (1, 1, H))                                             # (G, N, H*N)

    out = pl.pallas_call(
        gat2_kernel,
        out_shape=jax.ShapeDtypeStruct((G, N, H * D), jnp.float32),
        grid=(G,),
        in_specs=[
            pl.BlockSpec((None, N, IN_DIM), lambda g: (g, 0, 0)),   # x            (per graph)
            pl.BlockSpec((None, N, H * N),  lambda g: (g, 0, 0)),   # additive bias (per graph)
            pl.BlockSpec((IN_DIM, IN_DIM),  lambda g: (0, 0)),      # W1.T
            pl.BlockSpec((IN_DIM, H * D),   lambda g: (0, 0)),      # W2.T
            pl.BlockSpec((H * D, 2 * H),    lambda g: (0, 0)),      # [attn_l | attn_r]
            pl.BlockSpec((H, H * N),        lambda g: (0, 0)),      # head -> lane-group expand
            pl.BlockSpec((N, H * N),        lambda g: (0, 0)),      # src-selection mask
            pl.BlockSpec((H * N, H * N),    lambda g: (0, 0)),      # per-group sum matrix
            pl.BlockSpec((H * N, H * D),    lambda g: (0, 0)),      # block-diagonal ft2 mask
        ],
        out_specs=pl.BlockSpec((None, N, H * D), lambda g: (g, 0, 0)),
        compiler_params=pltpu.CompilerParams(dimension_semantics=("parallel",)),
    )(x, bias_wide, w1t, w2f, apack, expand, selmask, gsum, bdmask)
    return out.reshape(G, N, H, D)


# ---------------- parameter construction (deterministic) ----------------
def xavier_normal(key, shape, fan_in, fan_out, gain):
    std = gain * jnp.sqrt(2.0 / (fan_in + fan_out))
    return std * jax.random.normal(key, shape, dtype=jnp.float32)


def build_params(key):
    k1, k2, k3, k4 = jax.random.split(key, 4)
    gain = 1.414
    # PyTorch nn.Linear weight shapes: fc1: (in, in), fc2: (H*D, in)
    W1 = xavier_normal(k1, (IN_DIM, IN_DIM), IN_DIM, IN_DIM, gain)
    W2 = xavier_normal(k2, (NUM_HEADS * OUT_DIM, IN_DIM), IN_DIM, NUM_HEADS * OUT_DIM, gain)
    # attn_l / attn_r: (H, D, 1); PyTorch xavier fans for this shape: fan_in=D, fan_out=H
    attn_l = xavier_normal(k3, (NUM_HEADS, OUT_DIM, 1), OUT_DIM, NUM_HEADS, gain)
    attn_r = xavier_normal(k4, (NUM_HEADS, OUT_DIM, 1), OUT_DIM, NUM_HEADS, gain)
    return W1, W2, attn_l, attn_r


def ref_forward(x, W1, W2, attn_l, attn_r, adj):
    """Pure-JAX single-graph reference matching the PyTorch forward (no dropout/residual)."""
    ft1 = x @ W1.T
    h2 = jnp.where(ft1 > 0, ft1, ALPHA * ft1)
    ft2 = (h2 @ W2.T).reshape(x.shape[0], NUM_HEADS, OUT_DIM)           # (N, H, D)
    a1 = jnp.einsum('nhd,hd->nh', ft2, attn_l[..., 0])                  # src scores
    a2 = jnp.einsum('nhd,hd->nh', ft2, attn_r[..., 0])                  # dst scores
    e = a2.T[:, :, None] + a1.T[:, None, :]                             # (H, dst, src)
    e = jnp.where(e > 0, e, ALPHA * e)
    mask = adj[None] > 0
    e = jnp.where(mask, e, -1e30)
    e = e - e.max(-1, keepdims=True)
    p = jnp.where(mask, jnp.exp(e), 0.0)
    att = p / p.sum(-1, keepdims=True)                                  # (H, dst, src)
    return jnp.einsum('hij,jhd->ihd', att, ft2)                         # (N, H, D)


if __name__ == "__main__":
    key = jax.random.PRNGKey(0)
    kx, kadj, kp = jax.random.split(key, 3)

    G = 8  # batch of independent graphs behind the "parallel" grid axis

    # node features
    x = jax.random.normal(kx, (G, N_NODES, IN_DIM), dtype=jnp.float32)

    # random directed graphs with self-loops; adj[g, dst, src]
    adj = (jax.random.uniform(kadj, (G, N_NODES, N_NODES)) < 0.4).astype(jnp.float32)
    adj = jnp.maximum(adj, jnp.eye(N_NODES, dtype=jnp.float32)[None])

    W1, W2, attn_l, attn_r = build_params(kp)

    out = gat2_forward(x, adj, W1, W2, attn_l, attn_r)
    out = jax.block_until_ready(out)

    ref = jax.vmap(ref_forward, in_axes=(0, None, None, None, None, 0))(
        x, W1, W2, attn_l, attn_r, adj)

    assert out.shape == (G, N_NODES, NUM_HEADS, OUT_DIM)
    # Exact softmax division -> tight tolerance restored (review correctness concern).
    assert bool(jnp.allclose(out, ref, atol=1e-4, rtol=1e-4)), "mismatch vs JAX reference"

    print("KERNEL_OK")
</pallas_src>

<mosaic_0001>
module attributes {stable_mosaic.version = 11 : i64} {
  func.func @gat2_kernel(%arg0: i32, %arg1: memref<1x8x32xf32, #tpu.memory_space<vmem>>, %arg2: memref<1x8x32xf32, #tpu.memory_space<vmem>>, %arg3: memref<32x32xf32, #tpu.memory_space<vmem>>, %arg4: memref<32x32xf32, #tpu.memory_space<vmem>>, %arg5: memref<32x8xf32, #tpu.memory_space<vmem>>, %arg6: memref<4x32xf32, #tpu.memory_space<vmem>>, %arg7: memref<8x32xf32, #tpu.memory_space<vmem>>, %arg8: memref<32x32xf32, #tpu.memory_space<vmem>>, %arg9: memref<32x32xf32, #tpu.memory_space<vmem>>, %arg10: memref<1x8x32xf32, #tpu.memory_space<vmem>>) attributes {dimension_semantics = [#tpu.dimension_semantics<parallel>], iteration_bounds = array<i64: 8>, scalar_prefetch = 0 : i64, scratch_operands = 0 : i64, tpu.core_type = #tpu.core_type<tc>, window_params = [{transform_indices = @transform_0, window_bounds = array<i64: 1, 8, 32>}, {transform_indices = @transform_1, window_bounds = array<i64: 1, 8, 32>}, {pipeline_mode = #tpu.pipeline_mode<synchronous>, transform_indices = @transform_2, window_bounds = array<i64: 32, 32>}, {pipeline_mode = #tpu.pipeline_mode<synchronous>, transform_indices = @transform_3, window_bounds = array<i64: 32, 32>}, {pipeline_mode = #tpu.pipeline_mode<synchronous>, transform_indices = @transform_4, window_bounds = array<i64: 32, 8>}, {pipeline_mode = #tpu.pipeline_mode<synchronous>, transform_indices = @transform_5, window_bounds = array<i64: 4, 32>}, {pipeline_mode = #tpu.pipeline_mode<synchronous>, transform_indices = @transform_6, window_bounds = array<i64: 8, 32>}, {pipeline_mode = #tpu.pipeline_mode<synchronous>, transform_indices = @transform_7, window_bounds = array<i64: 32, 32>}, {pipeline_mode = #tpu.pipeline_mode<synchronous>, transform_indices = @transform_8, window_bounds = array<i64: 32, 32>}, {transform_indices = @transform_9, window_bounds = array<i64: 1, 8, 32>}]} {
    %c0 = arith.constant 0 : index
    %c0_0 = arith.constant 0 : index
    %c0_1 = arith.constant 0 : index
    %0 = vector.load %arg1[%c0, %c0_0, %c0_1] : memref<1x8x32xf32, #tpu.memory_space<vmem>>, vector<1x8x32xf32>
    %1 = vector.shape_cast %0 : vector<1x8x32xf32> to vector<8x32xf32>
    %c0_2 = arith.constant 0 : index
    %c0_3 = arith.constant 0 : index
    %2 = vector.load %arg3[%c0_2, %c0_3] : memref<32x32xf32, #tpu.memory_space<vmem>>, vector<32x32xf32>
    %cst = arith.constant dense<0.000000e+00> : vector<8x32xf32>
    %3 = tpu.matmul %1, %2, %cst {dimension_numbers = #tpu.dot_dimension_numbers<[1], [0], [0], [1], [0, 0, 1, 1], [], []>} : vector<8x32xf32>, vector<32x32xf32>, vector<8x32xf32> -> vector<8x32xf32>
    %cst_4 = arith.constant 0.000000e+00 : f32
    %4 = vector.broadcast %cst_4 : f32 to vector<8x32xf32>
    %5 = arith.cmpf ogt, %3, %4 : vector<8x32xf32>
    %cst_5 = arith.constant 2.000000e-01 : f32
    %6 = vector.broadcast %cst_5 : f32 to vector<8x32xf32>
    %7 = arith.mulf %6, %3 : vector<8x32xf32>
    %8 = arith.select %5, %3, %7 : vector<8x32xi1>, vector<8x32xf32>
    %c0_6 = arith.constant 0 : index
    %c0_7 = arith.constant 0 : index
    %9 = vector.load %arg4[%c0_6, %c0_7] : memref<32x32xf32, #tpu.memory_space<vmem>>, vector<32x32xf32>
    %cst_8 = arith.constant dense<0.000000e+00> : vector<8x32xf32>
    %10 = tpu.matmul %8, %9, %cst_8 {dimension_numbers = #tpu.dot_dimension_numbers<[1], [0], [0], [1], [0, 0, 1, 1], [], []>} : vector<8x32xf32>, vector<32x32xf32>, vector<8x32xf32> -> vector<8x32xf32>
    %c0_9 = arith.constant 0 : index
    %c0_10 = arith.constant 0 : index
    %11 = vector.load %arg5[%c0_9, %c0_10] : memref<32x8xf32, #tpu.memory_space<vmem>>, vector<32x8xf32>
    %cst_11 = arith.constant dense<0.000000e+00> : vector<8x8xf32>
    %12 = tpu.matmul %10, %11, %cst_11 {dimension_numbers = #tpu.dot_dimension_numbers<[1], [0], [0], [1], [0, 0, 1, 1], [], []>} : vector<8x32xf32>, vector<32x8xf32>, vector<8x8xf32> -> vector<8x8xf32>
    %13 = vector.extract_strided_slice %12 {offsets = [0, 0], sizes = [8, 4], strides = [1, 1]} : vector<8x8xf32> to vector<8x4xf32>
    %14 = vector.extract_strided_slice %12 {offsets = [0, 4], sizes = [8, 4], strides = [1, 1]} : vector<8x8xf32> to vector<8x4xf32>
    %c0_12 = arith.constant 0 : index
    %c0_13 = arith.constant 0 : index
    %15 = vector.load %arg6[%c0_12, %c0_13] : memref<4x32xf32, #tpu.memory_space<vmem>>, vector<4x32xf32>
    %cst_14 = arith.constant dense<0.000000e+00> : vector<8x32xf32>
    %16 = tpu.matmul %14, %15, %cst_14 {dimension_numbers = #tpu.dot_dimension_numbers<[1], [0], [0], [1], [0, 0, 1, 1], [], []>} : vector<8x4xf32>, vector<4x32xf32>, vector<8x32xf32> -> vector<8x32xf32>
    %c0_15 = arith.constant 0 : index
    %c0_16 = arith.constant 0 : index
    %17 = vector.load %arg6[%c0_15, %c0_16] : memref<4x32xf32, #tpu.memory_space<vmem>>, vector<4x32xf32>
    %cst_17 = arith.constant dense<0.000000e+00> : vector<8x32xf32>
    %18 = tpu.matmul %13, %17, %cst_17 {dimension_numbers = #tpu.dot_dimension_numbers<[1], [0], [0], [1], [0, 0, 1, 1], [], []>} : vector<8x4xf32>, vector<4x32xf32>, vector<8x32xf32> -> vector<8x32xf32>
    %c0_18 = arith.constant 0 : index
    %c0_19 = arith.constant 0 : index
    %19 = vector.load %arg7[%c0_18, %c0_19] : memref<8x32xf32, #tpu.memory_space<vmem>>, vector<8x32xf32>
    %20 = arith.mulf %18, %19 : vector<8x32xf32>
    %cst_20 = arith.constant dense<0.000000e+00> : vector<32xf32>
    %21 = vector.multi_reduction <add>, %20, %cst_20 [0] : vector<8x32xf32> to vector<32xf32>
    %22 = vector.shape_cast %21 : vector<32xf32> to vector<1x32xf32>
    %23 = vector.broadcast %22 : vector<1x32xf32> to vector<8x32xf32>
    %24 = arith.addf %16, %23 : vector<8x32xf32>
    %cst_21 = arith.constant 0.000000e+00 : f32
    %25 = vector.broadcast %cst_21 : f32 to vector<8x32xf32>
    %26 = arith.cmpf ogt, %24, %25 : vector<8x32xf32>
    %cst_22 = arith.constant 2.000000e-01 : f32
    %27 = vector.broadcast %cst_22 : f32 to vector<8x32xf32>
    %28 = arith.mulf %27, %24 : vector<8x32xf32>
    %29 = arith.select %26, %24, %28 : vector<8x32xi1>, vector<8x32xf32>
    %c0_23 = arith.constant 0 : index
    %c0_24 = arith.constant 0 : index
    %c0_25 = arith.constant 0 : index
    %30 = vector.load %arg2[%c0_23, %c0_24, %c0_25] : memref<1x8x32xf32, #tpu.memory_space<vmem>>, vector<1x8x32xf32>
    %31 = vector.shape_cast %30 : vector<1x8x32xf32> to vector<8x32xf32>
    %32 = arith.addf %29, %31 : vector<8x32xf32>
    %cst_26 = arith.constant dense<0xFF800000> : vector<8xf32>
    %33 = vector.multi_reduction <maximumf>, %32, %cst_26 [1] : vector<8x32xf32> to vector<8xf32>
    %34 = vector.shape_cast %33 : vector<8xf32> to vector<8x1xf32>
    %35 = vector.broadcast %34 : vector<8x1xf32> to vector<8x32xf32>
    %36 = arith.subf %32, %35 : vector<8x32xf32>
    %37 = math.exp %36 : vector<8x32xf32>
    %c0_27 = arith.constant 0 : index
    %c0_28 = arith.constant 0 : index
    %38 = vector.load %arg8[%c0_27, %c0_28] : memref<32x32xf32, #tpu.memory_space<vmem>>, vector<32x32xf32>
    %cst_29 = arith.constant dense<0.000000e+00> : vector<8x32xf32>
    %39 = tpu.matmul %37, %38, %cst_29 {dimension_numbers = #tpu.dot_dimension_numbers<[1], [0], [0], [1], [0, 0, 1, 1], [], []>} : vector<8x32xf32>, vector<32x32xf32>, vector<8x32xf32> -> vector<8x32xf32>
    %40 = arith.divf %37, %39 : vector<8x32xf32>
    %41 = tpu.concatenate %10, %10, %10, %10 in 0 : vector<8x32xf32>, vector<8x32xf32>, vector<8x32xf32>, vector<8x32xf32> -> vector<32x32xf32>
    %c0_30 = arith.constant 0 : index
    %c0_31 = arith.constant 0 : index
    %42 = vector.load %arg9[%c0_30, %c0_31] : memref<32x32xf32, #tpu.memory_space<vmem>>, vector<32x32xf32>
    %43 = arith.mulf %41, %42 : vector<32x32xf32>
    %cst_32 = arith.constant dense<0.000000e+00> : vector<8x32xf32>
    %44 = tpu.matmul %40, %43, %cst_32 {dimension_numbers = #tpu.dot_dimension_numbers<[1], [0], [0], [1], [0, 0, 1, 1], [], []>} : vector<8x32xf32>, vector<32x32xf32>, vector<8x32xf32> -> vector<8x32xf32>
    %c0_33 = arith.constant 0 : index
    %c0_34 = arith.constant 0 : index
    %c0_35 = arith.constant 0 : index
    %45 = vector.load %arg10[%c0_33, %c0_34, %c0_35] : memref<1x8x32xf32, #tpu.memory_space<vmem>>, vector<1x8x32xf32>
    %46 = vector.shape_cast %45 : vector<1x8x32xf32> to vector<8x32xf32>
    %47 = vector.shape_cast %44 : vector<8x32xf32> to vector<1x8x32xf32>
    tpu.vector_store %arg10[%c0_33, %c0_34, %c0_35], %47 {strides = array<i32>} : memref<1x8x32xf32, #tpu.memory_space<vmem>>, vector<1x8x32xf32>,
    return
  }
  func.func @transform_0(%arg0: i32) -> (i32, i32, i32) {
    %c0_i32 = arith.constant 0 : i32
    %c0_i32_0 = arith.constant 0 : i32
    %c0_i32_1 = arith.constant 0 : i32
    return %arg0, %c0_i32, %c0_i32_0 : i32, i32, i32
  }
  func.func @transform_1(%arg0: i32) -> (i32, i32, i32) {
    %c0_i32 = arith.constant 0 : i32
    %c0_i32_0 = arith.constant 0 : i32
    %c0_i32_1 = arith.constant 0 : i32
    return %arg0, %c0_i32, %c0_i32_0 : i32, i32, i32
  }
  func.func @transform_2(%arg0: i32) -> (i32, i32) {
    %c0_i32 = arith.constant 0 : i32
    %c0_i32_0 = arith.constant 0 : i32
    %c0_i32_1 = arith.constant 0 : i32
    return %c0_i32, %c0_i32_0 : i32, i32
  }
  func.func @transform_3(%arg0: i32) -> (i32, i32) {
    %c0_i32 = arith.constant 0 : i32
    %c0_i32_0 = arith.constant 0 : i32
    %c0_i32_1 = arith.constant 0 : i32
    return %c0_i32, %c0_i32_0 : i32, i32
  }
  func.func @transform_4(%arg0: i32) -> (i32, i32) {
    %c0_i32 = arith.constant 0 : i32
    %c0_i32_0 = arith.constant 0 : i32
    %c0_i32_1 = arith.constant 0 : i32
    return %c0_i32, %c0_i32_0 : i32, i32
  }
  func.func @transform_5(%arg0: i32) -> (i32, i32) {
    %c0_i32 = arith.constant 0 : i32
    %c0_i32_0 = arith.constant 0 : i32
    %c0_i32_1 = arith.constant 0 : i32
    return %c0_i32, %c0_i32_0 : i32, i32
  }
  func.func @transform_6(%arg0: i32) -> (i32, i32) {
    %c0_i32 = arith.constant 0 : i32
    %c0_i32_0 = arith.constant 0 : i32
    %c0_i32_1 = arith.constant 0 : i32
    return %c0_i32, %c0_i32_0 : i32, i32
  }
  func.func @transform_7(%arg0: i32) -> (i32, i32) {
    %c0_i32 = arith.constant 0 : i32
    %c0_i32_0 = arith.constant 0 : i32
    %c0_i32_1 = arith.constant 0 : i32
    return %c0_i32, %c0_i32_0 : i32, i32
  }
  func.func @transform_8(%arg0: i32) -> (i32, i32) {
    %c0_i32 = arith.constant 0 : i32
    %c0_i32_0 = arith.constant 0 : i32
    %c0_i32_1 = arith.constant 0 : i32
    return %c0_i32, %c0_i32_0 : i32, i32
  }
  func.func @transform_9(%arg0: i32) -> (i32, i32, i32) {
    %c0_i32 = arith.constant 0 : i32
    %c0_i32_0 = arith.constant 0 : i32
    %c0_i32_1 = arith.constant 0 : i32
    return %arg0, %c0_i32, %c0_i32_0 : i32, i32, i32
  }
}

</mosaic_0001>

<llo_original>
// kernel: tpu_custom_call.1
$region0: #{tpu_custom_call.1}
  #allocation0 [shape = 'u32[]', space=smem, size = 0x4, offset = 0x4, fixed_abs, tag = 'smem constant byte address 0x4 - core index']
  #allocation1 [shape = 'u32[72,128]{1,0:T(1,128)}', space=vmem, size = 0x9000, scoped, tag = 'internal scratch']
  %s0 = inlined_call_operand.hbm [shape: f32[8,8,32], index: 0, kind: input, shape index: {}]
  %s1 = inlined_call_operand.hbm [shape: f32[8,8,32], index: 1, kind: input, shape index: {}]
  %s2 = inlined_call_operand.vmem [shape: f32[32,32], index: 2, kind: input, shape index: {}]
  %s3 = inlined_call_operand.hbm [shape: f32[32,32], index: 3, kind: input, shape index: {}]
  %s4 = inlined_call_operand.vmem [shape: f32[32,8], index: 4, kind: input, shape index: {}]
  %s5 = inlined_call_operand.vmem [shape: f32[4,32], index: 5, kind: input, shape index: {}]
  %s6 = inlined_call_operand.vmem [shape: f32[8,32], index: 6, kind: input, shape index: {}]
  %s7 = inlined_call_operand.hbm [shape: f32[32,32], index: 7, kind: input, shape index: {}]
  %s8 = inlined_call_operand.hbm [shape: f32[32,32], index: 8, kind: input, shape index: {}]
  %s9 = inlined_call_operand.hbm [shape: f32[8,8,32], index: 9, kind: output, shape index: {}]
  %s10 = sld [smem:[#allocation0]]
  $region89: #{tpu_custom_call.1} parent=0
    _
  %s12 = ssub.s32 1, %s10
  %s13 = scalar_select 0, %s12, %s10
  $region1: #{tpu_custom_call.1} parent=0
    #allocation2 [shape = 'u8[8192]{0}', space=vmem, size = 0x2000, scoped, tag = 'input window, operand 0']
    #allocation3 [shape = 's32[2]{0}', space=sflag, size = 0x8, scoped, tag = 'scoped memory for tpu_custom_call.1']
    #allocation4 [shape = 's32[2]{0}', space=sflag, size = 0x8, scoped, tag = 'scoped memory for tpu_custom_call.1']
    #allocation5 [shape = 'u8[8192]{0}', space=vmem, size = 0x2000, scoped, tag = 'input window, operand 1']
    #allocation6 [shape = 's32[2]{0}', space=sflag, size = 0x8, scoped, tag = 'scoped memory for tpu_custom_call.1']
    #allocation7 [shape = 'u8[16384]{0}', space=vmem, size = 0x4000, scoped, tag = 'input window, operand 3, single buffered']
    #allocation8 [shape = 'u8[16384]{0}', space=vmem, size = 0x4000, scoped, tag = 'input window, operand 7, single buffered']
    #allocation9 [shape = 's32[1]{0}', space=sflag, size = 0x4, scoped, tag = 'scoped memory for tpu_custom_call.1']
    #allocation10 [shape = 'u8[16384]{0}', space=vmem, size = 0x4000, scoped, tag = 'input window, operand 8, single buffered']
    #allocation11 [shape = 'u8[8192]{0}', space=vmem, size = 0x2000, scoped, tag = 'output window, operand 0']
    %14 = vsyncpa [#allocation3], 0
    %s15 = scalar_lea.sflag [#allocation3], 1
    %16 = vsyncpa %s15, 0
    %17 = vsyncpa [#allocation6], 0
    %s18 = scalar_lea.sflag [#allocation6], 1
    %19 = vsyncpa %s18, 0
    %20 = vsyncpa [#allocation9], 0
    %21 = vsyncpa [#allocation4], 0
    %s22 = scalar_lea.sflag [#allocation4], 1
    %23 = vsyncpa %s22, 0
    loop: start=0, step=1, limit=10
    $region2: #{tpu_custom_call.1} parent=1 // loop_pre_header
      _
    $region3: #{tpu_custom_call.1} parent=1 // loop_header
      %s25 = sphi 0, %s29
      %p26 = scmp.ge.s32.totalorder %s25, 10
      %s35 = sphi 0, %s37
      %s38 = sphi 0, %s35
      %s39 = sphi 0, %s38
      %s55 = sphi 0, %s39
      %s61 = sphi 0, %s63
      %s64 = sphi 0, %s61
      %s65 = sphi 0, %s64
      %s81 = sphi 0, %s65
      %s85 = sphi 0, %s85
      %s87 = sphi 0, %s85
      %s88 = sphi 0, %s87
      %s102 = sphi 0, %s88
      %s106 = sphi 0, %s106
      %s108 = sphi 0, %s106
      %s109 = sphi 0, %s108
      %s123 = sphi 0, %s109
      %s127 = sphi 0, %s127
      %s129 = sphi 0, %s127
      %s130 = sphi 0, %s129
      %s144 = sphi 0, %s130
      %s148 = sphi 0, %s148
      %s150 = sphi 0, %s148
      %s151 = sphi 0, %s150
      %s165 = sphi 0, %s151
      %s169 = sphi 0, %s169
      %s171 = sphi 0, %s169
      %s172 = sphi 0, %s171
      %s186 = sphi 0, %s172
      %s190 = sphi 0, %s190
      %s192 = sphi 0, %s190
      %s193 = sphi 0, %s192
      %s207 = sphi 0, %s193
      %s211 = sphi 0, %s211
      %s213 = sphi 0, %s211
      %s214 = sphi 0, %s213
      %s228 = sphi 0, %s214
      %s234 = sphi 0, %s236
      %s237 = sphi 0, %s234
      %s238 = sphi 0, %s237
      %s254 = sphi 0, %s238
    $region4: #{tpu_custom_call.1} parent=1 // loop_header_branch
      %28 = sbr.rel (%p26) target = $region8
    $region5: #{tpu_custom_call.1} parent=1 // loop_body
      %s30 = ssub.s32 %s25, 1
      %s31 = ssub.s32 %s25, 2
      %s32 = sadd.s32 %s25, 1
      %s33 = ssub.s32 %s25, %s32
      %p34 = scmp.eq.s32.totalorder %s33, 0
      %s36 = sadd.s32 %s35, 1
      %s37 = scalar_select %p34, %s35, %s36
      %p40 = pneg %p34
      %p41 = scmp.eq.s32.totalorder %s25, 7
      %p42 = por %p40, %p41
      %p43 = scmp.ne.s32.totalorder %s35, %s38
      %p44 = scmp.eq.s32.totalorder %s25, 0
      %p45 = por %p43, %p44
      %p46 = scmp.ne.s32.totalorder %s35, %s38
      %p47 = scmp.eq.s32.totalorder %s30, 7
      %p48 = por %p46, %p47
      %p49 = scmp.ne.s32.totalorder %s38, %s39
      %p50 = scmp.eq.s32.totalorder %s30, 0
      %p51 = por %p49, %p50
      %p52 = scmp.ne.s32.totalorder %s38, %s39
      %p53 = scmp.eq.s32.totalorder %s31, 7
      %p54 = por %p52, %p53
      %p56 = scmp.ne.s32.totalorder %s39, %s55
      %p57 = scmp.eq.s32.totalorder %s31, 0
      %p58 = por %p56, %p57
      %s59 = ssub.s32 %s25, %s32
      %p60 = scmp.eq.s32.totalorder %s59, 0
      %s62 = sadd.s32 %s61, 1
      %s63 = scalar_select %p60, %s61, %s62
      %p66 = pneg %p60
      %p67 = scmp.eq.s32.totalorder %s25, 7
      %p68 = por %p66, %p67
      %p69 = scmp.ne.s32.totalorder %s61, %s64
      %p70 = scmp.eq.s32.totalorder %s25, 0
      %p71 = por %p69, %p70
      %p72 = scmp.ne.s32.totalorder %s61, %s64
      %p73 = scmp.eq.s32.totalorder %s30, 7
      %p74 = por %p72, %p73
      %p75 = scmp.ne.s32.totalorder %s64, %s65
      %p76 = scmp.eq.s32.totalorder %s30, 0
      %p77 = por %p75, %p76
      %p78 = scmp.ne.s32.totalorder %s64, %s65
      %p79 = scmp.eq.s32.totalorder %s31, 7
      %p80 = por %p78, %p79
      %p82 = scmp.ne.s32.totalorder %s65, %s81
      %p83 = scmp.eq.s32.totalorder %s31, 0
      %p84 = por %p82, %p83
      %s86 = sadd.s32 %s85, 1
      %p89 = scmp.eq.s32.totalorder %s25, 7
      %p90 = scmp.ne.s32.totalorder %s85, %s87
      %p91 = scmp.eq.s32.totalorder %s25, 0
      %p92 = por %p90, %p91
      %p93 = scmp.ne.s32.totalorder %s85, %s87
      %p94 = scmp.eq.s32.totalorder %s30, 7
      %p95 = por %p93, %p94
      %p96 = scmp.ne.s32.totalorder %s87, %s88
      %p97 = scmp.eq.s32.totalorder %s30, 0
      %p98 = por %p96, %p97
      %p99 = scmp.ne.s32.totalorder %s87, %s88
      %p100 = scmp.eq.s32.totalorder %s31, 7
      %p101 = por %p99, %p100
      %p103 = scmp.ne.s32.totalorder %s88, %s102
      %p104 = scmp.eq.s32.totalorder %s31, 0
      %p105 = por %p103, %p104
      %s107 = sadd.s32 %s106, 1
      %p110 = scmp.eq.s32.totalorder %s25, 7
      %p111 = scmp.ne.s32.totalorder %s106, %s108
      %p112 = scmp.eq.s32.totalorder %s25, 0
      %p113 = por %p111, %p112
      %p114 = scmp.ne.s32.totalorder %s106, %s108
      %p115 = scmp.eq.s32.totalorder %s30, 7
      %p116 = por %p114, %p115
      %p117 = scmp.ne.s32.totalorder %s108, %s109
      %p118 = scmp.eq.s32.totalorder %s30, 0
      %p119 = por %p117, %p118
      %p120 = scmp.ne.s32.totalorder %s108, %s109
      %p121 = scmp.eq.s32.totalorder %s31, 7
      %p122 = por %p120, %p121
      %p124 = scmp.ne.s32.totalorder %s109, %s123
      %p125 = scmp.eq.s32.totalorder %s31, 0
      %p126 = por %p124, %p125
      %s128 = sadd.s32 %s127, 1
      %p131 = scmp.eq.s32.totalorder %s25, 7
      %p132 = scmp.ne.s32.totalorder %s127, %s129
      %p133 = scmp.eq.s32.totalorder %s25, 0
      %p134 = por %p132, %p133
      %p135 = scmp.ne.s32.totalorder %s127, %s129
      %p136 = scmp.eq.s32.totalorder %s30, 7
      %p137 = por %p135, %p136
      %p138 = scmp.ne.s32.totalorder %s129, %s130
      %p139 = scmp.eq.s32.totalorder %s30, 0
      %p140 = por %p138, %p139
      %p141 = scmp.ne.s32.totalorder %s129, %s130
      %p142 = scmp.eq.s32.totalorder %s31, 7
      %p143 = por %p141, %p142
      %p145 = scmp.ne.s32.totalorder %s130, %s144
      %p146 = scmp.eq.s32.totalorder %s31, 0
      %p147 = por %p145, %p146
      %s149 = sadd.s32 %s148, 1
      %p152 = scmp.eq.s32.totalorder %s25, 7
      %p153 = scmp.ne.s32.totalorder %s148, %s150
      %p154 = scmp.eq.s32.totalorder %s25, 0
      %p155 = por %p153, %p154
      %p156 = scmp.ne.s32.totalorder %s148, %s150
      %p157 = scmp.eq.s32.totalorder %s30, 7
      %p158 = por %p156, %p157
      %p159 = scmp.ne.s32.totalorder %s150, %s151
      %p160 = scmp.eq.s32.totalorder %s30, 0
      %p161 = por %p159, %p160
      %p162 = scmp.ne.s32.totalorder %s150, %s151
      %p163 = scmp.eq.s32.totalorder %s31, 7
      %p164 = por %p162, %p163
      %p166 = scmp.ne.s32.totalorder %s151, %s165
      %p167 = scmp.eq.s32.totalorder %s31, 0
      %p168 = por %p166, %p167
      %s170 = sadd.s32 %s169, 1
      %p173 = scmp.eq.s32.totalorder %s25, 7
      %p174 = scmp.ne.s32.totalorder %s169, %s171
      %p175 = scmp.eq.s32.totalorder %s25, 0
      %p176 = por %p174, %p175
      %p177 = scmp.ne.s32.totalorder %s169, %s171
      %p178 = scmp.eq.s32.totalorder %s30, 7
      %p179 = por %p177, %p178
      %p180 = scmp.ne.s32.totalorder %s171, %s172
      %p181 = scmp.eq.s32.totalorder %s30, 0
      %p182 = por %p180, %p181
      %p183 = scmp.ne.s32.totalorder %s171, %s172
      %p184 = scmp.eq.s32.totalorder %s31, 7
      %p185 = por %p183, %p184
      %p187 = scmp.ne.s32.totalorder %s172, %s186
      %p188 = scmp.eq.s32.totalorder %s31, 0
      %p189 = por %p187, %p188
      %s191 = sadd.s32 %s190, 1
      %p194 = scmp.eq.s32.totalorder %s25, 7
      %p195 = scmp.ne.s32.totalorder %s190, %s192
      %p196 = scmp.eq.s32.totalorder %s25, 0
      %p197 = por %p195, %p196
      %p198 = scmp.ne.s32.totalorder %s190, %s192
      %p199 = scmp.eq.s32.totalorder %s30, 7
      %p200 = por %p198, %p199
      %p201 = scmp.ne.s32.totalorder %s192, %s193
      %p202 = scmp.eq.s32.totalorder %s30, 0
      %p203 = por %p201, %p202
      %p204 = scmp.ne.s32.totalorder %s192, %s193
      %p205 = scmp.eq.s32.totalorder %s31, 7
      %p206 = por %p204, %p205
      %p208 = scmp.ne.s32.totalorder %s193, %s207
      %p209 = scmp.eq.s32.totalorder %s31, 0
      %p210 = por %p208, %p209
      %s212 = sadd.s32 %s211, 1
      %p215 = scmp.eq.s32.totalorder %s25, 7
      %p216 = scmp.ne.s32.totalorder %s211, %s213
      %p217 = scmp.eq.s32.totalorder %s25, 0
      %p218 = por %p216, %p217
      %p219 = scmp.ne.s32.totalorder %s211, %s213
      %p220 = scmp.eq.s32.totalorder %s30, 7
      %p221 = por %p219, %p220
      %p222 = scmp.ne.s32.totalorder %s213, %s214
      %p223 = scmp.eq.s32.totalorder %s30, 0
      %p224 = por %p222, %p223
      %p225 = scmp.ne.s32.totalorder %s213, %s214
      %p226 = scmp.eq.s32.totalorder %s31, 7
      %p227 = por %p225, %p226
      %p229 = scmp.ne.s32.totalorder %s214, %s228
      %p230 = scmp.eq.s32.totalorder %s31, 0
      %p231 = por %p229, %p230
      %s232 = ssub.s32 %s25, %s32
      %p233 = scmp.eq.s32.totalorder %s232, 0
      %s235 = sadd.s32 %s234, 1
      %s236 = scalar_select %p233, %s234, %s235
      %p239 = pneg %p233
      %p240 = scmp.eq.s32.totalorder %s25, 7
      %p241 = por %p239, %p240
      %p242 = scmp.ne.s32.totalorder %s234, %s237
      %p243 = scmp.eq.s32.totalorder %s25, 0
      %p244 = por %p242, %p243
      %p245 = scmp.ne.s32.totalorder %s234, %s237
      %p246 = scmp.eq.s32.totalorder %s30, 7
      %p247 = por %p245, %p246
      %p248 = scmp.ne.s32.totalorder %s237, %s238
      %p249 = scmp.eq.s32.totalorder %s30, 0
      %p250 = por %p248, %p249
      %p251 = scmp.ne.s32.totalorder %s237, %s238
      %p252 = scmp.eq.s32.totalorder %s31, 7
      %p253 = por %p251, %p252
      %p255 = scmp.ne.s32.totalorder %s238, %s254
      %p256 = scmp.eq.s32.totalorder %s31, 0
      %p257 = por %p255, %p256
      %p258 = scmp.le.s32.totalorder 1, %s25
      %p259 = scmp.lt.s32.totalorder %s25, 9
      %p260 = pnand %p258, %p259
      %p261 = pneg %p260
      // Predicated region
      $region9: #{tpu_custom_call.1} parent=5 // pred_check
        _
      $region10: #{tpu_custom_call.1} parent=5 // pred_check_branch
        %263 = sbr.rel (%p260) target = $region12
      $region11: #{tpu_custom_call.1} parent=5 // pred_region
        %s264 = ssub.s32 %s25, 1
        // Predicated region
        $region13: #{tpu_custom_call.1} parent=11 // pred_check
          %p265 = pneg %p98
        $region14: #{tpu_custom_call.1} parent=11 // pred_check_branch
          %267 = sbr.rel (%p265) target = $region16
        $region15: #{tpu_custom_call.1} parent=11 // pred_region
          _
        $region16: #{tpu_custom_call.1} parent=11 // pred_fallthru
          _
        // Predicated region
        $region17: #{tpu_custom_call.1} parent=11 // pred_check
          %p268 = pneg %p119
        $region18: #{tpu_custom_call.1} parent=11 // pred_check_branch
          %270 = sbr.rel (%p268) target = $region20
        $region19: #{tpu_custom_call.1} parent=11 // pred_region
          %272 = vsyncadd [#allocation6], 0
          %s273 = sshll.u32 %s3, 4
          %s274 = int_to_ptr.hbm [resolvable:$true] %s273
          %s275 = sshll.u32 [#allocation7], 4
          %s276 = int_to_ptr.vmem [resolvable:$true] %s275
          %281 = dma.hbm_to_vmem [thread:$0]  %s274, 512, %s276, [#allocation6], 128, 128, 8
        $region20: #{tpu_custom_call.1} parent=11 // pred_fallthru
          _
        // Predicated region
        $region21: #{tpu_custom_call.1} parent=11 // pred_check
          %p282 = pneg %p140
        $region22: #{tpu_custom_call.1} parent=11 // pred_check_branch
          %284 = sbr.rel (%p282) target = $region24
        $region23: #{tpu_custom_call.1} parent=11 // pred_region
          _
        $region24: #{tpu_custom_call.1} parent=11 // pred_fallthru
          _
        // Predicated region
        $region25: #{tpu_custom_call.1} parent=11 // pred_check
          %p285 = pneg %p161
        $region26: #{tpu_custom_call.1} parent=11 // pred_check_branch
          %287 = sbr.rel (%p285) target = $region28
        $region27: #{tpu_custom_call.1} parent=11 // pred_region
          _
        $region28: #{tpu_custom_call.1} parent=11 // pred_fallthru
          _
        // Predicated region
        $region29: #{tpu_custom_call.1} parent=11 // pred_check
          %p288 = pneg %p182
        $region30: #{tpu_custom_call.1} parent=11 // pred_check_branch
          %290 = sbr.rel (%p288) target = $region32
        $region31: #{tpu_custom_call.1} parent=11 // pred_region
          _
        $region32: #{tpu_custom_call.1} parent=11 // pred_fallthru
          _
        // Predicated region
        $region33: #{tpu_custom_call.1} parent=11 // pred_check
          %p291 = pneg %p203
        $region34: #{tpu_custom_call.1} parent=11 // pred_check_branch
          %293 = sbr.rel (%p291) target = $region36
        $region35: #{tpu_custom_call.1} parent=11 // pred_region
          %295 = vsyncadd [#allocation9], 0
          %s296 = sshll.u32 %s7, 4
          %s297 = int_to_ptr.hbm [resolvable:$true] %s296
          %s298 = sshll.u32 [#allocation8], 4
          %s299 = int_to_ptr.vmem [resolvable:$true] %s298
          %304 = dma.hbm_to_vmem [thread:$0]  %s297, 512, %s299, [#allocation9], 128, 128, 8
        $region36: #{tpu_custom_call.1} parent=11 // pred_fallthru
          _
        // Predicated region
        $region37: #{tpu_custom_call.1} parent=11 // pred_check
          %p305 = pneg %p224
        $region38: #{tpu_custom_call.1} parent=11 // pred_check_branch
          %307 = sbr.rel (%p305) target = $region40
        $region39: #{tpu_custom_call.1} parent=11 // pred_region
          %309 = vsyncadd [#allocation9], 0
          %s310 = sshll.u32 %s8, 4
          %s311 = int_to_ptr.hbm [resolvable:$true] %s310
          %s312 = sshll.u32 [#allocation10], 4
          %s313 = int_to_ptr.vmem [resolvable:$true] %s312
          %318 = dma.hbm_to_vmem [thread:$0]  %s311, 512, %s313, [#allocation9], 128, 128, 8
        $region40: #{tpu_custom_call.1} parent=11 // pred_fallthru
          _
      $region12: #{tpu_custom_call.1} parent=5 // pred_fallthru
        _
      %p319 = scmp.lt.s32.totalorder %s25, 8
      // Predicated region
      $region41: #{tpu_custom_call.1} parent=5 // pred_check
        %p320 = pneg %p319
      $region42: #{tpu_custom_call.1} parent=5 // pred_check_branch
        %322 = sbr.rel (%p320) target = $region44
      $region43: #{tpu_custom_call.1} parent=5 // pred_region
        // Predicated region
        $region45: #{tpu_custom_call.1} parent=43 // pred_check
          %p323 = pneg %p45
        $region46: #{tpu_custom_call.1} parent=43 // pred_check_branch
          %325 = sbr.rel (%p323) target = $region48
        $region47: #{tpu_custom_call.1} parent=43 // pred_region
          %s326 = sand.u32 %s35, 1
          %s327 = scalar_lea.sflag [#allocation3], %s326
          %s328 = sand.u32 %s35, 1
          %s329 = smul.addr %s328, 8
          %s330 = scalar_lea.vmem [#allocation2], %s329
          %332 = vsyncadd %s327, 0
          %s333 = smul.addr %s25, 8
          %s334 = scalar_lea.hbm %s0, %s333
          %s336 = sshll.u32 %s334, 4
          %s337 = int_to_ptr.hbm [resolvable:$true] %s336
          %s338 = sshll.u32 %s330, 4
          %s339 = int_to_ptr.vmem [resolvable:$true] %s338
          %341 = dma.hbm_to_vmem [thread:$0]  %s337, 128, %s339, %s327
        $region48: #{tpu_custom_call.1} parent=43 // pred_fallthru
          _
        // Predicated region
        $region49: #{tpu_custom_call.1} parent=43 // pred_check
          %p342 = pneg %p71
        $region50: #{tpu_custom_call.1} parent=43 // pred_check_branch
          %344 = sbr.rel (%p342) target = $region52
        $region51: #{tpu_custom_call.1} parent=43 // pred_region
          %s345 = sand.u32 %s25, 1
          %s346 = scalar_lea.sflag [#allocation6], %s345
          %s347 = sand.u32 %s61, 1
          %s348 = smul.addr %s347, 8
          %s349 = scalar_lea.vmem [#allocation5], %s348
          %351 = vsyncadd %s346, 0
          %s352 = smul.addr %s25, 8
          %s353 = scalar_lea.hbm %s1, %s352
          %s355 = sshll.u32 %s353, 4
          %s356 = int_to_ptr.hbm [resolvable:$true] %s355
          %s357 = sshll.u32 %s349, 4
          %s358 = int_to_ptr.vmem [resolvable:$true] %s357
          %360 = dma.hbm_to_vmem [thread:$0]  %s356, 128, %s358, %s346
        $region52: #{tpu_custom_call.1} parent=43 // pred_fallthru
          _
      $region44: #{tpu_custom_call.1} parent=5 // pred_fallthru
        _
      %p361 = scmp.le.s32.totalorder 1, %s25
      %p362 = scmp.lt.s32.totalorder %s25, 9
      %p363 = pnand %p361, %p362
      %p364 = pneg %p363
      // Predicated region
      $region53: #{tpu_custom_call.1} parent=5 // pred_check
        _
      $region54: #{tpu_custom_call.1} parent=5 // pred_check_branch
        %366 = sbr.rel (%p363) target = $region56
      $region55: #{tpu_custom_call.1} parent=5 // pred_region
        %s367 = ssub.s32 %s25, 1
        %s368 = sand.u32 %s38, 1
        %s369 = scalar_lea.sflag [#allocation3], %s368
        %s370 = sand.u32 %s38, 1
        %s371 = smul.addr %s370, 8
        %s372 = scalar_lea.vmem [#allocation2], %s371
        // Predicated region
        $region57: #{tpu_custom_call.1} parent=55 // pred_check
          %p373 = pneg %p51
        $region58: #{tpu_custom_call.1} parent=55 // pred_check_branch
          %375 = sbr.rel (%p373) target = $region60
        $region59: #{tpu_custom_call.1} parent=55 // pred_region
          %377 = dma.done %s369, 128
        $region60: #{tpu_custom_call.1} parent=55 // pred_fallthru
          _
        %s378 = sand.u32 %s30, 1
        %s379 = scalar_lea.sflag [#allocation6], %s378
        %s380 = sand.u32 %s64, 1
        %s381 = smul.addr %s380, 8
        %s382 = scalar_lea.vmem [#allocation5], %s381
        // Predicated region
        $region61: #{tpu_custom_call.1} parent=55 // pred_check
          %p383 = pneg %p77
        $region62: #{tpu_custom_call.1} parent=55 // pred_check_branch
          %385 = sbr.rel (%p383) target = $region64
        $region63: #{tpu_custom_call.1} parent=55 // pred_region
          %387 = dma.done %s379, 128
        $region64: #{tpu_custom_call.1} parent=55 // pred_fallthru
          _
        // Predicated region
        $region65: #{tpu_custom_call.1} parent=55 // pred_check
          %p388 = pneg %p119
        $region66: #{tpu_custom_call.1} parent=55 // pred_check_branch
          %390 = sbr.rel (%p388) target = $region68
        $region67: #{tpu_custom_call.1} parent=55 // pred_region
          %392 = dma.done [#allocation6], 512
        $region68: #{tpu_custom_call.1} parent=55 // pred_fallthru
          _
        // Predicated region
        $region69: #{tpu_custom_call.1} parent=55 // pred_check
          %p393 = pneg %p203
        $region70: #{tpu_custom_call.1} parent=55 // pred_check_branch
          %395 = sbr.rel (%p393) target = $region72
        $region71: #{tpu_custom_call.1} parent=55 // pred_region
          %397 = dma.done [#allocation9], 512
        $region72: #{tpu_custom_call.1} parent=55 // pred_fallthru
          _
        // Predicated region
        $region73: #{tpu_custom_call.1} parent=55 // pred_check
          %p398 = pneg %p224
        $region74: #{tpu_custom_call.1} parent=55 // pred_check_branch
          %400 = sbr.rel (%p398) target = $region76
        $region75: #{tpu_custom_call.1} parent=55 // pred_region
          %402 = dma.done [#allocation9], 512
        $region76: #{tpu_custom_call.1} parent=55 // pred_fallthru
          _
        %s403 = sand.u32 %s38, 1
        %s404 = scalar_lea.sflag [#allocation3], %s403
        %s405 = sand.u32 %s38, 1
        %s406 = smul.addr %s405, 8
        %s407 = scalar_lea.vmem [#allocation2], %s406
        %p408 = pneg %p51
        %p409 = pneg %p48
        %s410 = sand.u32 %s30, 1
        %s411 = scalar_lea.sflag [#allocation6], %s410
        %s412 = sand.u32 %s64, 1
        %s413 = smul.addr %s412, 8
        %s414 = scalar_lea.vmem [#allocation5], %s413
        %p415 = pneg %p77
        %p416 = pneg %p74
        %p417 = pneg %p98
        %p418 = pneg %p95
        %p419 = pneg %p119
        %p420 = pneg %p116
        %p421 = pneg %p140
        %p422 = pneg %p137
        %p423 = pneg %p161
        %p424 = pneg %p158
        %p425 = pneg %p182
        %p426 = pneg %p179
        %p427 = pneg %p203
        %p428 = pneg %p200
        %p429 = pneg %p224
        %p430 = pneg %p221
        %p431 = pneg %p250
        %p432 = pneg %p247
        %s433 = sand.u32 %s237, 1
        %s434 = scalar_lea.sflag [#allocation4], %s433
        %s435 = sand.u32 %s237, 1
        %s436 = smul.addr %s435, 8
        %s437 = scalar_lea.vmem [#allocation11], %s436
        %v438 = vld [vmem:[%s372] sm:$0xff]
        %v439 = vld [vmem:[%s2] sm:$0xff]
        %v440 = vld [vmem:[%s2 + $0x8] sm:$0xff]
        %v441 = vld [vmem:[%s2 + $0x10] sm:$0xff]
        %v442 = vld [vmem:[%s2 + $0x18] sm:$0xff]
        %vm443 = vcmask 261120
        %v445 = vsel %vm443, %v438, 0
        %447 = vmatpush.msra.mxu0 0.0
        %448 = vmatpush.msra.mxu0 0.0
        %449 = vmatpush.msra.mxu0 0.0
        %450 = vmatpush.msra.mxu0 0.0
        %451 = vmatpush.msra.mxu0 0.0
        %452 = vmatpush.msra.mxu0 0.0
        %453 = vmatpush.msra.mxu0 0.0
        %454 = vmatpush.msra.mxu0 0.0
        %455 = vmatpush.msra.mxu0 0.0
        %456 = vmatpush.msra.mxu0 0.0
        %457 = vmatpush.msra.mxu0 0.0
        %458 = vmatpush.msra.mxu0 0.0
        %459 = vmatpush.msra.mxu0 %v442
        %460 = vmatpush.msra.mxu0 %v441
        %461 = vmatpush.msra.mxu0 %v440
        %462 = vmatpush.msra.mxu0 %v439
        %463 = vmatmul.f32.gmra.mxu0 %v445
        %v464 = vpop.f32.mrf.mxu0
        %v465 = vadd.f32 0.0, %v464
        %466 = vdwg.mxu0
        %vm467 = vcmp.gt.f32.partialorder %v465, 0.0
        %v468 = vmul.f32 %v465, 0.2
        %v469 = vsel %vm467, %v465, %v468
        %v470 = vld [vmem:[#allocation7] sm:$0xff]
        %v471 = vld [vmem:[#allocation7 + $0x8] sm:$0xff]
        %v472 = vld [vmem:[#allocation7 + $0x10] sm:$0xff]
        %v473 = vld [vmem:[#allocation7 + $0x18] sm:$0xff]
        %v475 = vsel %vm443, %v469, 0
        %477 = vmatpush.msra.mxu0 0.0
        %478 = vmatpush.msra.mxu0 0.0
        %479 = vmatpush.msra.mxu0 0.0
        %480 = vmatpush.msra.mxu0 0.0
        %481 = vmatpush.msra.mxu0 0.0
        %482 = vmatpush.msra.mxu0 0.0
        %483 = vmatpush.msra.mxu0 0.0
        %484 = vmatpush.msra.mxu0 0.0
        %485 = vmatpush.msra.mxu0 0.0
        %486 = vmatpush.msra.mxu0 0.0
        %487 = vmatpush.msra.mxu0 0.0
        %488 = vmatpush.msra.mxu0 0.0
        %489 = vmatpush.msra.mxu0 %v473
        %490 = vmatpush.msra.mxu0 %v472
        %491 = vmatpush.msra.mxu0 %v471
        %492 = vmatpush.msra.mxu0 %v470
        %493 = vmatmul.f32.gmra.mxu0 %v475
        %v494 = vpop.f32.mrf.mxu0
        %v495 = vadd.f32 0.0, %v494
        %496 = vdwg.mxu0
        %v497 = vld [vmem:[%s4] sm:$0xff]
        %v498 = vld [vmem:[%s4 + $0x8] sm:$0xff]
        %v499 = vld [vmem:[%s4 + $0x10] sm:$0xff]
        %v500 = vld [vmem:[%s4 + $0x18] sm:$0xff]
        %v502 = vsel %vm443, %v495, 0
        %504 = vmatpush.msra.mxu0 0.0
        %505 = vmatpush.msra.mxu0 0.0
        %506 = vmatpush.msra.mxu0 0.0
        %507 = vmatpush.msra.mxu0 0.0
        %508 = vmatpush.msra.mxu0 0.0
        %509 = vmatpush.msra.mxu0 0.0
        %510 = vmatpush.msra.mxu0 0.0
        %511 = vmatpush.msra.mxu0 0.0
        %512 = vmatpush.msra.mxu0 0.0
        %513 = vmatpush.msra.mxu0 0.0
        %514 = vmatpush.msra.mxu0 0.0
        %515 = vmatpush.msra.mxu0 0.0
        %516 = vmatpush.msra.mxu0 %v500
        %517 = vmatpush.msra.mxu0 %v499
        %518 = vmatpush.msra.mxu0 %v498
        %519 = vmatpush.msra.mxu0 %v497
        %520 = vmatmul.f32.gmra.mxu0 %v502
        %v521 = vpop.f32.mrf.mxu0
        %v522 = vadd.f32 0.0, %v521
        %523 = vdwg.mxu0
        %v524 = vld [vmem:[%s5] sm:$0xf]
        %vm525 = vcmask 31744
        %v527 = vsel %vm525, %v522, 0
        %vm529 = vcmask 1043456
        %v531 = vsel %vm529, %v524, 0
        %533 = vmatpush.msra.mxu0 0.0
        %534 = vmatpush.msra.mxu0 0.0
        %535 = vmatpush.msra.mxu0 0.0
        %536 = vmatpush.msra.mxu0 0.0
        %537 = vmatpush.msra.mxu0 0.0
        %538 = vmatpush.msra.mxu0 0.0
        %539 = vmatpush.msra.mxu0 0.0
        %540 = vmatpush.msra.mxu0 0.0
        %541 = vmatpush.msra.mxu0 0.0
        %542 = vmatpush.msra.mxu0 0.0
        %543 = vmatpush.msra.mxu0 0.0
        %544 = vmatpush.msra.mxu0 0.0
        %545 = vmatpush.msra.mxu0 0.0
        %546 = vmatpush.msra.mxu0 0.0
        %547 = vmatpush.msra.mxu0 0.0
        %548 = vmatpush.msra.mxu0 %v531
        %549 = vmatmul.f32.gmra.mxu0 %v527
        %v550 = vpop.f32.mrf.mxu0
        %v551 = vadd.f32 0.0, %v550
        %552 = vdwg.mxu0
        %v553 = vld [vmem:[%s6] sm:$0xff]
        %v554 = vmul.f32 %v551, %v553
        %v555 = vsel %vm443, %v554, 0.0
        %v556 = vrot.slane %v555, 4
        %v557 = vadd.f32 %v555, %v556
        %v558 = vrot.slane %v557, 2
        %v559 = vadd.f32 %v557, %v558
        %v560 = vrot.slane %v559, 1
        %v561 = vadd.f32 %v559, %v560
        %562 = vrot.lane.b32.xlu0 %v522, 124
        %v563 = vpop.permute.xlu0 %562
        %v564 = vsel %vm525, %v563, 0
        %566 = vmatpush.msra.mxu0 0.0
        %567 = vmatpush.msra.mxu0 0.0
        %568 = vmatpush.msra.mxu0 0.0
        %569 = vmatpush.msra.mxu0 0.0
        %570 = vmatpush.msra.mxu0 0.0
        %571 = vmatpush.msra.mxu0 0.0
        %572 = vmatpush.msra.mxu0 0.0
        %573 = vmatpush.msra.mxu0 0.0
        %574 = vmatpush.msra.mxu0 0.0
        %575 = vmatpush.msra.mxu0 0.0
        %576 = vmatpush.msra.mxu0 0.0
        %577 = vmatpush.msra.mxu0 0.0
        %578 = vmatpush.msra.mxu0 0.0
        %579 = vmatpush.msra.mxu0 0.0
        %580 = vmatpush.msra.mxu0 0.0
        %581 = vmatpush.msra.mxu0 %v531
        %582 = vmatmul.f32.gmra.mxu0 %v564
        %v583 = vpop.f32.mrf.mxu0
        %v584 = vadd.f32 %v561, %v583
        %585 = vdwg.mxu0
        %vm586 = vcmp.gt.f32.partialorder %v584, 0.0
        %v587 = vmul.f32 %v584, 0.2
        %v588 = vsel %vm586, %v584, %v587
        %v589 = vld [vmem:[%s382] sm:$0xff]
        %v590 = vadd.f32 %v588, %v589
        %v591 = vsel %vm443, %v590, -inf
        %592 = vmax.xlane.f32.xlu0 %v591
        %v593 = vpop.xlane.xlu0 %592
        %v594 = vsub.f32 %v590, %v593
        %v595 = vmul.f32 %v594, 1.442695
        %v596 = vpow.pop %v595
        %v597 = vld [vmem:[#allocation8] sm:$0xff]
        %v598 = vld [vmem:[#allocation8 + $0x8] sm:$0xff]
        %v599 = vld [vmem:[#allocation8 + $0x10] sm:$0xff]
        %v600 = vld [vmem:[#allocation8 + $0x18] sm:$0xff]
        %v602 = vsel %vm443, %v596, 0
        %604 = vmatpush.msra.mxu0 0.0
        %605 = vmatpush.msra.mxu0 0.0
        %606 = vmatpush.msra.mxu0 0.0
        %607 = vmatpush.msra.mxu0 0.0
        %608 = vmatpush.msra.mxu0 0.0
        %609 = vmatpush.msra.mxu0 0.0
        %610 = vmatpush.msra.mxu0 0.0
        %611 = vmatpush.msra.mxu0 0.0
        %612 = vmatpush.msra.mxu0 0.0
        %613 = vmatpush.msra.mxu0 0.0
        %614 = vmatpush.msra.mxu0 0.0
        %615 = vmatpush.msra.mxu0 0.0
        %616 = vmatpush.msra.mxu0 %v600
        %617 = vmatpush.msra.mxu0 %v599
        %618 = vmatpush.msra.mxu0 %v598
        %619 = vmatpush.msra.mxu0 %v597
        %620 = vmatmul.f32.gmra.mxu0 %v602
        %v621 = vpop.f32.mrf.mxu0
        %v622 = vadd.f32 0.0, %v621
        %623 = vdwg.mxu0
        %v624 = vrcp.pop %v622
        %v625 = vmul.f32 %v622, %v624
        %v626 = vsub.f32 1.0, %v625
        %v627 = vmul.f32 %v624, %v626
        %v628 = vadd.f32 %v624, %v627
        %vm629 = vweird.f32 %v622
        %vm630 = vweird.f32 %v624
        %vm631 = vmor %vm629, %vm630
        %v632 = vsel %vm631, %v624, %v628
        %v633 = vand.u32 2147483647, %v622
        %vm634 = vcmp.eq.f32.partialorder %v633, 8.507059e+37
        %v635 = vand.u32 %v622, 2147483648
        %v636 = vor.u32 1.1754944e-38, %v635
        %v637 = vsel %vm634, %v636, %v632
        %v638 = vmul.f32 %v596, %v637
        %v639 = vld [vmem:[#allocation10] sm:$0xff]
        %v640 = vld [vmem:[#allocation10 + $0x8] sm:$0xff]
        %v641 = vld [vmem:[#allocation10 + $0x10] sm:$0xff]
        %v642 = vld [vmem:[#allocation10 + $0x18] sm:$0xff]
        %v643 = vmul.f32 %v495, %v639
        %v644 = vmul.f32 %v495, %v640
        %v645 = vmul.f32 %v495, %v641
        %v646 = vmul.f32 %v495, %v642
        %v648 = vsel %vm443, %v638, 0
        %650 = vmatpush.msra.mxu0 0.0
        %651 = vmatpush.msra.mxu0 0.0
        %652 = vmatpush.msra.mxu0 0.0
        %653 = vmatpush.msra.mxu0 0.0
        %654 = vmatpush.msra.mxu0 0.0
        %655 = vmatpush.msra.mxu0 0.0
        %656 = vmatpush.msra.mxu0 0.0
        %657 = vmatpush.msra.mxu0 0.0
        %658 = vmatpush.msra.mxu0 0.0
        %659 = vmatpush.msra.mxu0 0.0
        %660 = vmatpush.msra.mxu0 0.0
        %661 = vmatpush.msra.mxu0 0.0
        %662 = vmatpush.msra.mxu0 %v646
        %663 = vmatpush.msra.mxu0 %v645
        %664 = vmatpush.msra.mxu0 %v644
        %665 = vmatpush.msra.mxu0 %v643
        %666 = vmatmul.f32.gmra.mxu0 %v648
        %v667 = vpop.f32.mrf.mxu0
        %v668 = vadd.f32 0.0, %v667
        %669 = vdwg.mxu0
        %670 = vst.msk [vmem:[%s437] sm:$0xff] %vm443, %v668
        %s671 = sand.u32 %s237, 1
        %s672 = scalar_lea.sflag [#allocation4], %s671
        %s673 = sand.u32 %s237, 1
        %s674 = smul.addr %s673, 8
        %s675 = scalar_lea.vmem [#allocation11], %s674
        // Predicated region
        $region77: #{tpu_custom_call.1} parent=55 // pred_check
          %p676 = pneg %p247
        $region78: #{tpu_custom_call.1} parent=55 // pred_check_branch
          %678 = sbr.rel (%p676) target = $region80
        $region79: #{tpu_custom_call.1} parent=55 // pred_region
          %680 = vsyncadd %s672, 0
          %s681 = smul.addr %s30, 8
          %s682 = scalar_lea.hbm %s9, %s681
          %s684 = sshll.u32 %s675, 4
          %s685 = int_to_ptr.vmem [resolvable:$true] %s684
          %s686 = sshll.u32 %s682, 4
          %s687 = int_to_ptr.hbm [resolvable:$true] %s686
          %689 = dma.vmem_to_hbm [thread:$0]  %s685, 128, %s687, %s672
        $region80: #{tpu_custom_call.1} parent=55 // pred_fallthru
          _
      $region56: #{tpu_custom_call.1} parent=5 // pred_fallthru
        _
      %p690 = scmp.le.s32.totalorder 2, %s25
      // Predicated region
      $region81: #{tpu_custom_call.1} parent=5 // pred_check
        %p691 = pneg %p690
      $region82: #{tpu_custom_call.1} parent=5 // pred_check_branch
        %693 = sbr.rel (%p691) target = $region84
      $region83: #{tpu_custom_call.1} parent=5 // pred_region
        %s694 = ssub.s32 %s25, 2
        // Predicated region
        $region85: #{tpu_custom_call.1} parent=83 // pred_check
          %p695 = pneg %p253
        $region86: #{tpu_custom_call.1} parent=83 // pred_check_branch
          %697 = sbr.rel (%p695) target = $region88
        $region87: #{tpu_custom_call.1} parent=83 // pred_region
          %s698 = sand.u32 %s238, 1
          %s699 = scalar_lea.sflag [#allocation4], %s698
          %s700 = sand.u32 %s238, 1
          %s701 = smul.addr %s700, 8
          %s702 = scalar_lea.vmem [#allocation11], %s701
          %704 = dma.done %s699, 128
        $region88: #{tpu_custom_call.1} parent=83 // pred_fallthru
          _
      $region84: #{tpu_custom_call.1} parent=5 // pred_fallthru
        _
    $region6: #{tpu_custom_call.1} parent=1 // loop_footer
      %s29 = sadd.s32 1, %s25
    $region7: #{tpu_custom_call.1} parent=1 // loop_footer_branch
      %24 = sbr.rel target = $region3
    $region8: #{tpu_custom_call.1} parent=1 // loop_exit
      _
    %705 = vsyncpa [#allocation3], 1
    %s706 = scalar_lea.sflag [#allocation3], 1
    %707 = vsyncpa %s706, 1
    %708 = vsyncpa [#allocation6], 1
    %s709 = scalar_lea.sflag [#allocation6], 1
    %710 = vsyncpa %s709, 1
    %711 = vsyncpa [#allocation9], 1
    %712 = vsyncpa [#allocation4], 1
    %s713 = scalar_lea.sflag [#allocation4], 1
    %714 = vsyncpa %s713, 1

</llo_original>
